<compile_context>
chip_gen: v5e
topology: v5e:2x2
jax: 0.10.0
libtpu: 0.0.40
codegen_flags: <defaults>
</compile_context>

<pallas_src>
import functools

import jax
import jax.numpy as jnp
from jax.experimental import pallas as pl
from jax.experimental.pallas import tpu as pltpu


def _block_kernel(eps, inv_n, L, Lp, has_scale_shift,
                  x_ref, w_ref, b_ref, gmat_ref, gamma_ref, beta_ref, *rest):
    """One batch step: conv1d(k=3, p=1) + GroupNorm + optional FiLM + SiLU."""
    if has_scale_shift:
        scale_ref, shift_ref, o_ref = rest
    else:
        (o_ref,) = rest

    x = x_ref[0]                                        # (Cp, Lp), matmul dtype
    lane = jax.lax.broadcasted_iota(jnp.int32, (1, Lp), 1)

    # k=0 / k=2 taps of the kernel-3, padding-1 conv as lane-rotated copies.
    x_prev = pltpu.roll(x, 1, axis=1)                   # x[:, t-1]
    x_next = pltpu.roll(x, Lp - 1, axis=1)              # x[:, t+1]
    if Lp == L:
        # No lane padding: the rotation wrap-around must be masked off the
        # sequence edges ((1, Lp) row mask broadcast over sublanes).
        x_prev = x_prev * (lane != 0).astype(x.dtype)
        x_next = x_next * (lane != (L - 1)).astype(x.dtype)
    # else: the zero lane-padding already supplies the edge zeros exactly.

    # All three taps fused into a single MXU matmul (K = 3*Cp), f32 accumulate.
    xs = jnp.concatenate([x_prev, x, x_next], axis=0)   # (3*Cp, Lp)
    y = jnp.dot(w_ref[...], xs, preferred_element_type=jnp.float32)
    y = y + b_ref[...]                                  # (C_out, Lp) f32

    # GroupNorm statistics: per-channel lane reduction, then a tiny
    # group-aggregation matmul broadcasts each group's sums back to its
    # channels.  Padded lanes are excluded; inv_n = 1/(cg * L_real).
    if Lp != L:
        valid = (lane < L).astype(jnp.float32)          # (1, Lp)
        ys = y * valid
    else:
        ys = y
    s1 = jnp.sum(ys, axis=1, keepdims=True)             # (C_out, 1)
    s2 = jnp.sum(ys * ys, axis=1, keepdims=True)        # (C_out, 1)
    gs1 = jnp.dot(gmat_ref[...], s1, preferred_element_type=jnp.float32)
    gs2 = jnp.dot(gmat_ref[...], s2, preferred_element_type=jnp.float32)
    mean = gs1 * inv_n
    var = jnp.maximum(gs2 * inv_n - mean * mean, 0.0)   # biased (torch) variance
    inv_std = jax.lax.rsqrt(var + eps)

    # Fold normalization, gamma/beta and FiLM into one per-channel FMA.
    a = inv_std * gamma_ref[...]                        # (C_out, 1)
    c = beta_ref[...] - mean * a
    if has_scale_shift:
        sp1 = scale_ref[0] + 1.0                        # (C_out, 1)
        a = a * sp1
        c = c * sp1 + shift_ref[0]
    z = y * a + c

    act = z * jax.nn.sigmoid(z)                         # SiLU
    if Lp != L:
        act = act * valid                               # zero the padded lanes
    o_ref[0] = act.astype(o_ref.dtype)


def block_forward(x, w, b, gamma, beta, groups=8, scale_shift=None,
                  eps=1e-5, matmul_dtype=jnp.float32):
    """x: (B, dim, L), w: (dim_out, dim, 3), b/gamma/beta: (dim_out,)."""
    B, C_in, L = x.shape
    C_out = w.shape[0]
    assert C_out % groups == 0
    G = groups
    cg = C_out // G

    itemsize = jnp.dtype(matmul_dtype).itemsize
    # Lane-align L (unmasked, lane-dense output stores) and sublane-align C_in
    # (tap slabs concatenate on tile boundaries; 16 covers bf16 packing).
    Lp = ((L + 127) // 128) * 128
    sub = 16 if itemsize < 4 else 8
    Cp = ((C_in + sub - 1) // sub) * sub

    xk = x.astype(matmul_dtype)
    if (Lp != L) or (Cp != C_in):
        xk = jnp.pad(xk, ((0, 0), (0, Cp - C_in), (0, Lp - L)))

    # Weight: (C_out, C_in, 3) -> (C_out, 3, Cp) -> (C_out, 3*Cp), tap-major K
    # matching the in-kernel [x_prev; x; x_next] sublane stack.
    wr = jnp.transpose(w, (0, 2, 1))
    if Cp != C_in:
        wr = jnp.pad(wr, ((0, 0), (0, 0), (0, Cp - C_in)))
    wr = wr.reshape(C_out, 3 * Cp).astype(matmul_dtype)

    br = b.reshape(C_out, 1).astype(jnp.float32)
    gr = gamma.reshape(C_out, 1).astype(jnp.float32)
    btr = beta.reshape(C_out, 1).astype(jnp.float32)

    # Group-aggregation matrix: gmat[i, j] = 1 iff channels i, j share a group.
    gid = jnp.arange(C_out, dtype=jnp.int32) // cg
    gmat = (gid[:, None] == gid[None, :]).astype(jnp.float32)

    has_ss = scale_shift is not None
    inputs = [xk, wr, br, gmat, gr, btr]
    in_specs = [
        pl.BlockSpec((1, Cp, Lp), lambda bb: (bb, 0, 0)),
        pl.BlockSpec((C_out, 3 * Cp), lambda bb: (0, 0)),
        pl.BlockSpec((C_out, 1), lambda bb: (0, 0)),
        pl.BlockSpec((C_out, C_out), lambda bb: (0, 0)),
        pl.BlockSpec((C_out, 1), lambda bb: (0, 0)),
        pl.BlockSpec((C_out, 1), lambda bb: (0, 0)),
    ]
    if has_ss:
        scale, shift = scale_shift
        scale = jnp.broadcast_to(scale.astype(jnp.float32), (B, C_out, 1))
        shift = jnp.broadcast_to(shift.astype(jnp.float32), (B, C_out, 1))
        inputs += [scale, shift]
        ss_spec = pl.BlockSpec((1, C_out, 1), lambda bb: (bb, 0, 0))
        in_specs += [ss_spec, ss_spec]

    kernel = functools.partial(
        _block_kernel, eps, 1.0 / float(cg * L), L, Lp, has_ss)

    # VMEM budget: double-buffered x / output blocks + in-kernel temporaries.
    # Clamped to 64 MiB so it stays safe on v7x (64 MiB physical VMEM).
    tile_bytes = (2 * Cp * Lp * itemsize          # x block, double-buffered
                  + 2 * C_out * Lp * 4            # output block, double-buffered
                  + 3 * Cp * Lp * itemsize        # stacked tap input
                  + 3 * C_out * Lp * 4)           # y / z / act temporaries
    vmem_limit = int(min(64 * 1024 * 1024,
                         max(32 * 1024 * 1024, 2 * tile_bytes)))

    out = pl.pallas_call(
        kernel,
        out_shape=jax.ShapeDtypeStruct((B, C_out, Lp), jnp.float32),
        grid_spec=pltpu.PrefetchScalarGridSpec(
            num_scalar_prefetch=0,
            grid=(B,),
            in_specs=in_specs,
            out_specs=pl.BlockSpec((1, C_out, Lp), lambda bb: (bb, 0, 0)),
        ),
        compiler_params=pltpu.CompilerParams(
            dimension_semantics=("parallel",),
            vmem_limit_bytes=vmem_limit,
        ),
    )(*inputs)

    if Lp != L:
        out = out[:, :, :L]
    return out


def _reference(x, w, b, gamma, beta, groups, scale_shift, eps=1e-5):
    """Pure-JAX reference matching torch semantics."""
    y = jax.lax.conv_general_dilated(
        x, w, window_strides=(1,), padding=((1, 1),),
        dimension_numbers=('NCH', 'OIH', 'NCH'))
    y = y + b[None, :, None]
    B, C, L = y.shape
    yg = y.reshape(B, groups, C // groups, L)
    mean = yg.mean(axis=(2, 3), keepdims=True)
    var = ((yg - mean) ** 2).mean(axis=(2, 3), keepdims=True)
    yn = (yg - mean) / jnp.sqrt(var + eps)
    yn = yn.reshape(B, C, L) * gamma[None, :, None] + beta[None, :, None]
    if scale_shift is not None:
        scale, shift = scale_shift
        yn = yn * (scale + 1.0) + shift
    return yn * jax.nn.sigmoid(yn)


if __name__ == "__main__":
    B, dim, dim_out, L, groups = 2, 4, 32, 16, 8

    key = jax.random.PRNGKey(0)
    k1, k2, k3, k4, k5 = jax.random.split(key, 5)

    x = jax.random.normal(k1, (B, dim, L), jnp.float32)

    # Deterministic parameter init (Conv1d default: U(-1/sqrt(fan_in), +...)).
    fan_in = dim * 3
    bound = 1.0 / (fan_in ** 0.5)
    w = jax.random.uniform(k2, (dim_out, dim, 3), jnp.float32, -bound, bound)
    b = jax.random.uniform(k3, (dim_out,), jnp.float32, -bound, bound)
    gamma = jnp.ones((dim_out,), jnp.float32)    # GroupNorm default weight
    beta = jnp.zeros((dim_out,), jnp.float32)    # GroupNorm default bias

    scale = 0.1 * jax.random.normal(k4, (B, dim_out, 1), jnp.float32)
    shift = 0.1 * jax.random.normal(k5, (B, dim_out, 1), jnp.float32)

    # f32 matmuls, with FiLM scale/shift.
    out = jax.block_until_ready(
        block_forward(x, w, b, gamma, beta, groups=groups,
                      scale_shift=(scale, shift)))
    ref = _reference(x, w, b, gamma, beta, groups, (scale, shift))
    assert out.shape == (B, dim_out, L)
    assert jnp.allclose(out, ref, atol=1e-4, rtol=1e-4), "mismatch (f32, scale_shift)"

    # f32, scale_shift=None (statically specialized path).
    out2 = jax.block_until_ready(
        block_forward(x, w, b, gamma, beta, groups=groups))
    ref2 = _reference(x, w, b, gamma, beta, groups, None)
    assert jnp.allclose(out2, ref2, atol=1e-4, rtol=1e-4), "mismatch (f32, no scale_shift)"

    # bf16 matmul inputs (f32 accumulation + f32 GroupNorm/SiLU epilogue).
    out3 = jax.block_until_ready(
        block_forward(x, w, b, gamma, beta, groups=groups,
                      scale_shift=(scale, shift), matmul_dtype=jnp.bfloat16))
    assert jnp.allclose(out3, ref, atol=5e-2, rtol=5e-2), "mismatch (bf16 matmul)"

    print("KERNEL_OK")
</pallas_src>

<mosaic_0001>
module attributes {stable_mosaic.version = 11 : i64} {
  func.func @_block_kernel(%arg0: i32, %arg1: memref<1x8x128xf32, #tpu.memory_space<vmem>>, %arg2: memref<32x24xf32, #tpu.memory_space<vmem>>, %arg3: memref<32x1xf32, #tpu.memory_space<vmem>>, %arg4: memref<32x32xf32, #tpu.memory_space<vmem>>, %arg5: memref<32x1xf32, #tpu.memory_space<vmem>>, %arg6: memref<32x1xf32, #tpu.memory_space<vmem>>, %arg7: memref<1x32x1xf32, #tpu.memory_space<vmem>>, %arg8: memref<1x32x1xf32, #tpu.memory_space<vmem>>, %arg9: memref<1x32x128xf32, #tpu.memory_space<vmem>>) attributes {dimension_semantics = [#tpu.dimension_semantics<parallel>], iteration_bounds = array<i64: 2>, scalar_prefetch = 0 : i64, scratch_operands = 0 : i64, tpu.core_type = #tpu.core_type<tc>, window_params = [{transform_indices = @transform_0, window_bounds = array<i64: 1, 8, 128>}, {pipeline_mode = #tpu.pipeline_mode<synchronous>, transform_indices = @transform_1, window_bounds = array<i64: 32, 24>}, {pipeline_mode = #tpu.pipeline_mode<synchronous>, transform_indices = @transform_2, window_bounds = array<i64: 32, 1>}, {pipeline_mode = #tpu.pipeline_mode<synchronous>, transform_indices = @transform_3, window_bounds = array<i64: 32, 32>}, {pipeline_mode = #tpu.pipeline_mode<synchronous>, transform_indices = @transform_4, window_bounds = array<i64: 32, 1>}, {pipeline_mode = #tpu.pipeline_mode<synchronous>, transform_indices = @transform_5, window_bounds = array<i64: 32, 1>}, {transform_indices = @transform_6, window_bounds = array<i64: 1, 32, 1>}, {transform_indices = @transform_7, window_bounds = array<i64: 1, 32, 1>}, {transform_indices = @transform_8, window_bounds = array<i64: 1, 32, 128>}]} {
    %c0 = arith.constant 0 : index
    %c0_0 = arith.constant 0 : index
    %c0_1 = arith.constant 0 : index
    %0 = vector.load %arg1[%c0, %c0_0, %c0_1] : memref<1x8x128xf32, #tpu.memory_space<vmem>>, vector<1x8x128xf32>
    %1 = vector.shape_cast %0 : vector<1x8x128xf32> to vector<8x128xf32>
    %2 = tpu.iota {dimensions = array<i32: 1>} : vector<1x128xi32>
    %c1_i32 = arith.constant 1 : i32
    %3 = tpu.dynamic_rotate %1 by %c1_i32 dim 1 : vector<8x128xf32>, i32 -> vector<8x128xf32>
    %c127_i32 = arith.constant 127 : i32
    %4 = tpu.dynamic_rotate %1 by %c127_i32 dim 1 : vector<8x128xf32>, i32 -> vector<8x128xf32>
    %5 = tpu.concatenate %3, %1, %4 in 0 : vector<8x128xf32>, vector<8x128xf32>, vector<8x128xf32> -> vector<24x128xf32>
    %c0_2 = arith.constant 0 : index
    %c0_3 = arith.constant 0 : index
    %6 = vector.load %arg2[%c0_2, %c0_3] : memref<32x24xf32, #tpu.memory_space<vmem>>, vector<32x24xf32>
    %cst = arith.constant dense<0.000000e+00> : vector<32x128xf32>
    %7 = tpu.matmul %6, %5, %cst {dimension_numbers = #tpu.dot_dimension_numbers<[1], [0], [0], [1], [0, 0, 1, 1], [], []>} : vector<32x24xf32>, vector<24x128xf32>, vector<32x128xf32> -> vector<32x128xf32>
    %c0_4 = arith.constant 0 : index
    %c0_5 = arith.constant 0 : index
    %8 = vector.load %arg3[%c0_4, %c0_5] : memref<32x1xf32, #tpu.memory_space<vmem>>, vector<32x1xf32>
    %9 = vector.broadcast %8 : vector<32x1xf32> to vector<32x128xf32>
    %10 = arith.addf %7, %9 : vector<32x128xf32>
    %c16_i32 = arith.constant 16 : i32
    %11 = vector.broadcast %c16_i32 : i32 to vector<1x128xi32>
    %12 = arith.cmpi slt, %2, %11 : vector<1x128xi32>
    %13 = arith.extui %12 : vector<1x128xi1> to vector<1x128xi32>
    %14 = arith.sitofp %13 : vector<1x128xi32> to vector<1x128xf32>
    %15 = vector.broadcast %14 : vector<1x128xf32> to vector<32x128xf32>
    %16 = arith.mulf %10, %15 : vector<32x128xf32>
    %cst_6 = arith.constant dense<0.000000e+00> : vector<32xf32>
    %17 = vector.multi_reduction <add>, %16, %cst_6 [1] : vector<32x128xf32> to vector<32xf32>
    %18 = vector.shape_cast %17 : vector<32xf32> to vector<32x1xf32>
    %19 = arith.mulf %16, %16 : vector<32x128xf32>
    %cst_7 = arith.constant dense<0.000000e+00> : vector<32xf32>
    %20 = vector.multi_reduction <add>, %19, %cst_7 [1] : vector<32x128xf32> to vector<32xf32>
    %21 = vector.shape_cast %20 : vector<32xf32> to vector<32x1xf32>
    %c0_8 = arith.constant 0 : index
    %c0_9 = arith.constant 0 : index
    %22 = vector.load %arg4[%c0_8, %c0_9] : memref<32x32xf32, #tpu.memory_space<vmem>>, vector<32x32xf32>
    %cst_10 = arith.constant dense<0.000000e+00> : vector<32x1xf32>
    %23 = tpu.matmul %22, %18, %cst_10 {dimension_numbers = #tpu.dot_dimension_numbers<[1], [0], [0], [1], [0, 0, 1, 1], [], []>} : vector<32x32xf32>, vector<32x1xf32>, vector<32x1xf32> -> vector<32x1xf32>
    %c0_11 = arith.constant 0 : index
    %c0_12 = arith.constant 0 : index
    %24 = vector.load %arg4[%c0_11, %c0_12] : memref<32x32xf32, #tpu.memory_space<vmem>>, vector<32x32xf32>
    %cst_13 = arith.constant dense<0.000000e+00> : vector<32x1xf32>
    %25 = tpu.matmul %24, %21, %cst_13 {dimension_numbers = #tpu.dot_dimension_numbers<[1], [0], [0], [1], [0, 0, 1, 1], [], []>} : vector<32x32xf32>, vector<32x1xf32>, vector<32x1xf32> -> vector<32x1xf32>
    %cst_14 = arith.constant 1.562500e-02 : f32
    %26 = vector.broadcast %cst_14 : f32 to vector<32x1xf32>
    %27 = arith.mulf %23, %26 : vector<32x1xf32>
    %cst_15 = arith.constant 1.562500e-02 : f32
    %28 = vector.broadcast %cst_15 : f32 to vector<32x1xf32>
    %29 = arith.mulf %25, %28 : vector<32x1xf32>
    %30 = arith.mulf %27, %27 : vector<32x1xf32>
    %31 = arith.subf %29, %30 : vector<32x1xf32>
    %cst_16 = arith.constant 0.000000e+00 : f32
    %32 = vector.broadcast %cst_16 : f32 to vector<32x1xf32>
    %33 = arith.maximumf %31, %32 : vector<32x1xf32>
    %cst_17 = arith.constant 9.99999974E-6 : f32
    %34 = vector.broadcast %cst_17 : f32 to vector<32x1xf32>
    %35 = arith.addf %33, %34 : vector<32x1xf32>
    %36 = math.rsqrt %35 : vector<32x1xf32>
    %c0_18 = arith.constant 0 : index
    %c0_19 = arith.constant 0 : index
    %37 = vector.load %arg5[%c0_18, %c0_19] : memref<32x1xf32, #tpu.memory_space<vmem>>, vector<32x1xf32>
    %38 = arith.mulf %36, %37 : vector<32x1xf32>
    %c0_20 = arith.constant 0 : index
    %c0_21 = arith.constant 0 : index
    %39 = vector.load %arg6[%c0_20, %c0_21] : memref<32x1xf32, #tpu.memory_space<vmem>>, vector<32x1xf32>
    %40 = arith.mulf %27, %38 : vector<32x1xf32>
    %41 = arith.subf %39, %40 : vector<32x1xf32>
    %c0_22 = arith.constant 0 : index
    %c0_23 = arith.constant 0 : index
    %c0_24 = arith.constant 0 : index
    %42 = vector.load %arg7[%c0_22, %c0_23, %c0_24] : memref<1x32x1xf32, #tpu.memory_space<vmem>>, vector<1x32x1xf32>
    %43 = vector.shape_cast %42 : vector<1x32x1xf32> to vector<32x1xf32>
    %cst_25 = arith.constant 1.000000e+00 : f32
    %44 = vector.broadcast %cst_25 : f32 to vector<32x1xf32>
    %45 = arith.addf %43, %44 : vector<32x1xf32>
    %46 = arith.mulf %38, %45 : vector<32x1xf32>
    %47 = arith.mulf %41, %45 : vector<32x1xf32>
    %c0_26 = arith.constant 0 : index
    %c0_27 = arith.constant 0 : index
    %c0_28 = arith.constant 0 : index
    %48 = vector.load %arg8[%c0_26, %c0_27, %c0_28] : memref<1x32x1xf32, #tpu.memory_space<vmem>>, vector<1x32x1xf32>
    %49 = vector.shape_cast %48 : vector<1x32x1xf32> to vector<32x1xf32>
    %50 = arith.addf %47, %49 : vector<32x1xf32>
    %51 = vector.broadcast %46 : vector<32x1xf32> to vector<32x128xf32>
    %52 = arith.mulf %10, %51 : vector<32x128xf32>
    %53 = vector.broadcast %50 : vector<32x1xf32> to vector<32x128xf32>
    %54 = arith.addf %52, %53 : vector<32x128xf32>
    %55 = arith.negf %54 : vector<32x128xf32>
    %56 = math.exp %55 : vector<32x128xf32>
    %cst_29 = arith.constant 1.000000e+00 : f32
    %57 = vector.broadcast %cst_29 : f32 to vector<32x128xf32>
    %58 = arith.addf %57, %56 : vector<32x128xf32>
    %59 = arith.divf %57, %58 : vector<32x128xf32>
    %60 = arith.mulf %54, %59 : vector<32x128xf32>
    %61 = vector.broadcast %14 : vector<1x128xf32> to vector<32x128xf32>
    %62 = arith.mulf %60, %61 : vector<32x128xf32>
    %c0_30 = arith.constant 0 : index
    %c0_31 = arith.constant 0 : index
    %c0_32 = arith.constant 0 : index
    %63 = vector.load %arg9[%c0_30, %c0_31, %c0_32] : memref<1x32x128xf32, #tpu.memory_space<vmem>>, vector<1x32x128xf32>
    %64 = vector.shape_cast %63 : vector<1x32x128xf32> to vector<32x128xf32>
    %65 = vector.shape_cast %62 : vector<32x128xf32> to vector<1x32x128xf32>
    tpu.vector_store %arg9[%c0_30, %c0_31, %c0_32], %65 {strides = array<i32>} : memref<1x32x128xf32, #tpu.memory_space<vmem>>, vector<1x32x128xf32>,
    return
  }
  func.func @transform_0(%arg0: i32) -> (i32, i32, i32) {
    %c0_i32 = arith.constant 0 : i32
    %c0_i32_0 = arith.constant 0 : i32
    %c0_i32_1 = arith.constant 0 : i32
    return %arg0, %c0_i32, %c0_i32_0 : i32, i32, i32
  }
  func.func @transform_1(%arg0: i32) -> (i32, i32) {
    %c0_i32 = arith.constant 0 : i32
    %c0_i32_0 = arith.constant 0 : i32
    %c0_i32_1 = arith.constant 0 : i32
    return %c0_i32, %c0_i32_0 : i32, i32
  }
  func.func @transform_2(%arg0: i32) -> (i32, i32) {
    %c0_i32 = arith.constant 0 : i32
    %c0_i32_0 = arith.constant 0 : i32
    %c0_i32_1 = arith.constant 0 : i32
    return %c0_i32, %c0_i32_0 : i32, i32
  }
  func.func @transform_3(%arg0: i32) -> (i32, i32) {
    %c0_i32 = arith.constant 0 : i32
    %c0_i32_0 = arith.constant 0 : i32
    %c0_i32_1 = arith.constant 0 : i32
    return %c0_i32, %c0_i32_0 : i32, i32
  }
  func.func @transform_4(%arg0: i32) -> (i32, i32) {
    %c0_i32 = arith.constant 0 : i32
    %c0_i32_0 = arith.constant 0 : i32
    %c0_i32_1 = arith.constant 0 : i32
    return %c0_i32, %c0_i32_0 : i32, i32
  }
  func.func @transform_5(%arg0: i32) -> (i32, i32) {
    %c0_i32 = arith.constant 0 : i32
    %c0_i32_0 = arith.constant 0 : i32
    %c0_i32_1 = arith.constant 0 : i32
    return %c0_i32, %c0_i32_0 : i32, i32
  }
  func.func @transform_6(%arg0: i32) -> (i32, i32, i32) {
    %c0_i32 = arith.constant 0 : i32
    %c0_i32_0 = arith.constant 0 : i32
    %c0_i32_1 = arith.constant 0 : i32
    return %arg0, %c0_i32, %c0_i32_0 : i32, i32, i32
  }
  func.func @transform_7(%arg0: i32) -> (i32, i32, i32) {
    %c0_i32 = arith.constant 0 : i32
    %c0_i32_0 = arith.constant 0 : i32
    %c0_i32_1 = arith.constant 0 : i32
    return %arg0, %c0_i32, %c0_i32_0 : i32, i32, i32
  }
  func.func @transform_8(%arg0: i32) -> (i32, i32, i32) {
    %c0_i32 = arith.constant 0 : i32
    %c0_i32_0 = arith.constant 0 : i32
    %c0_i32_1 = arith.constant 0 : i32
    return %arg0, %c0_i32, %c0_i32_0 : i32, i32, i32
  }
}

</mosaic_0001>

<llo_original>
// kernel: tpu_custom_call.1
$region0: #{tpu_custom_call.1}
  #allocation0 [shape = 'u32[]', space=smem, size = 0x4, offset = 0x4, fixed_abs, tag = 'smem constant byte address 0x4 - core index']
  #allocation1 [shape = 'u32[72,128]{1,0:T(1,128)}', space=vmem, size = 0x9000, scoped, tag = 'internal scratch']
  %s0 = inlined_call_operand.vmem [shape: f32[2,8,128], index: 0, kind: input, shape index: {}]
  %s1 = inlined_call_operand.vmem [shape: f32[32,24], index: 1, kind: input, shape index: {}]
  %s2 = inlined_call_operand.vmem [shape: f32[32,1], index: 2, kind: input, shape index: {}]
  %s3 = inlined_call_operand.vmem [shape: f32[32,32], index: 3, kind: input, shape index: {}]
  %s4 = inlined_call_operand.vmem [shape: f32[32,1], index: 4, kind: input, shape index: {}]
  %s5 = inlined_call_operand.vmem [shape: f32[32,1], index: 5, kind: input, shape index: {}]
  %s6 = inlined_call_operand.vmem [shape: f32[2,32,1], index: 6, kind: input, shape index: {}]
  %s7 = inlined_call_operand.vmem [shape: f32[2,32,1], index: 7, kind: input, shape index: {}]
  %s8 = inlined_call_operand.hbm [shape: f32[2,32,128], index: 8, kind: output, shape index: {}]
  %s9 = sld [smem:[#allocation0]]
  $region65: #{tpu_custom_call.1} parent=0
    _
  %s11 = ssub.s32 1, %s9
  %s12 = scalar_select 0, %s11, %s9
  $region1: #{tpu_custom_call.1} parent=0
    #allocation2 [shape = 'u8[32768]{0}', space=vmem, size = 0x8000, scoped, tag = 'output window, operand 0']
    #allocation3 [shape = 's32[2]{0}', space=sflag, size = 0x8, scoped, tag = 'scoped memory for tpu_custom_call.1']
    %13 = vsyncpa [#allocation3], 0
    %s14 = scalar_lea.sflag [#allocation3], 1
    %15 = vsyncpa %s14, 0
    loop: start=0, step=1, limit=4
    $region2: #{tpu_custom_call.1} parent=1 // loop_pre_header
      _
    $region3: #{tpu_custom_call.1} parent=1 // loop_header
      %s17 = sphi 0, %s21
      %p18 = scmp.ge.s32.totalorder %s17, 4
      %s27 = sphi 0, %s29
      %s30 = sphi 0, %s27
      %s31 = sphi 0, %s30
      %s47 = sphi 0, %s31
      %s51 = sphi 0, %s51
      %s53 = sphi 0, %s51
      %s54 = sphi 0, %s53
      %s68 = sphi 0, %s54
      %s72 = sphi 0, %s72
      %s74 = sphi 0, %s72
      %s75 = sphi 0, %s74
      %s89 = sphi 0, %s75
      %s93 = sphi 0, %s93
      %s95 = sphi 0, %s93
      %s96 = sphi 0, %s95
      %s110 = sphi 0, %s96
      %s114 = sphi 0, %s114
      %s116 = sphi 0, %s114
      %s117 = sphi 0, %s116
      %s131 = sphi 0, %s117
      %s135 = sphi 0, %s135
      %s137 = sphi 0, %s135
      %s138 = sphi 0, %s137
      %s152 = sphi 0, %s138
      %s158 = sphi 0, %s160
      %s161 = sphi 0, %s158
      %s162 = sphi 0, %s161
      %s178 = sphi 0, %s162
      %s184 = sphi 0, %s186
      %s187 = sphi 0, %s184
      %s188 = sphi 0, %s187
      %s204 = sphi 0, %s188
      %s210 = sphi 0, %s212
      %s213 = sphi 0, %s210
      %s214 = sphi 0, %s213
      %s230 = sphi 0, %s214
    $region4: #{tpu_custom_call.1} parent=1 // loop_header_branch
      %20 = sbr.rel (%p18) target = $region8
    $region5: #{tpu_custom_call.1} parent=1 // loop_body
      %s22 = ssub.s32 %s17, 1
      %s23 = ssub.s32 %s17, 2
      %s24 = sadd.s32 %s17, 1
      %s25 = ssub.s32 %s17, %s24
      %p26 = scmp.eq.s32.totalorder %s25, 0
      %s28 = sadd.s32 %s27, 1
      %s29 = scalar_select %p26, %s27, %s28
      %p32 = pneg %p26
      %p33 = scmp.eq.s32.totalorder %s17, 1
      %p34 = por %p32, %p33
      %p35 = scmp.ne.s32.totalorder %s27, %s30
      %p36 = scmp.eq.s32.totalorder %s17, 0
      %p37 = por %p35, %p36
      %p38 = scmp.ne.s32.totalorder %s27, %s30
      %p39 = scmp.eq.s32.totalorder %s22, 1
      %p40 = por %p38, %p39
      %p41 = scmp.ne.s32.totalorder %s30, %s31
      %p42 = scmp.eq.s32.totalorder %s22, 0
      %p43 = por %p41, %p42
      %p44 = scmp.ne.s32.totalorder %s30, %s31
      %p45 = scmp.eq.s32.totalorder %s23, 1
      %p46 = por %p44, %p45
      %p48 = scmp.ne.s32.totalorder %s31, %s47
      %p49 = scmp.eq.s32.totalorder %s23, 0
      %p50 = por %p48, %p49
      %s52 = sadd.s32 %s51, 1
      %p55 = scmp.eq.s32.totalorder %s17, 1
      %p56 = scmp.ne.s32.totalorder %s51, %s53
      %p57 = scmp.eq.s32.totalorder %s17, 0
      %p58 = por %p56, %p57
      %p59 = scmp.ne.s32.totalorder %s51, %s53
      %p60 = scmp.eq.s32.totalorder %s22, 1
      %p61 = por %p59, %p60
      %p62 = scmp.ne.s32.totalorder %s53, %s54
      %p63 = scmp.eq.s32.totalorder %s22, 0
      %p64 = por %p62, %p63
      %p65 = scmp.ne.s32.totalorder %s53, %s54
      %p66 = scmp.eq.s32.totalorder %s23, 1
      %p67 = por %p65, %p66
      %p69 = scmp.ne.s32.totalorder %s54, %s68
      %p70 = scmp.eq.s32.totalorder %s23, 0
      %p71 = por %p69, %p70
      %s73 = sadd.s32 %s72, 1
      %p76 = scmp.eq.s32.totalorder %s17, 1
      %p77 = scmp.ne.s32.totalorder %s72, %s74
      %p78 = scmp.eq.s32.totalorder %s17, 0
      %p79 = por %p77, %p78
      %p80 = scmp.ne.s32.totalorder %s72, %s74
      %p81 = scmp.eq.s32.totalorder %s22, 1
      %p82 = por %p80, %p81
      %p83 = scmp.ne.s32.totalorder %s74, %s75
      %p84 = scmp.eq.s32.totalorder %s22, 0
      %p85 = por %p83, %p84
      %p86 = scmp.ne.s32.totalorder %s74, %s75
      %p87 = scmp.eq.s32.totalorder %s23, 1
      %p88 = por %p86, %p87
      %p90 = scmp.ne.s32.totalorder %s75, %s89
      %p91 = scmp.eq.s32.totalorder %s23, 0
      %p92 = por %p90, %p91
      %s94 = sadd.s32 %s93, 1
      %p97 = scmp.eq.s32.totalorder %s17, 1
      %p98 = scmp.ne.s32.totalorder %s93, %s95
      %p99 = scmp.eq.s32.totalorder %s17, 0
      %p100 = por %p98, %p99
      %p101 = scmp.ne.s32.totalorder %s93, %s95
      %p102 = scmp.eq.s32.totalorder %s22, 1
      %p103 = por %p101, %p102
      %p104 = scmp.ne.s32.totalorder %s95, %s96
      %p105 = scmp.eq.s32.totalorder %s22, 0
      %p106 = por %p104, %p105
      %p107 = scmp.ne.s32.totalorder %s95, %s96
      %p108 = scmp.eq.s32.totalorder %s23, 1
      %p109 = por %p107, %p108
      %p111 = scmp.ne.s32.totalorder %s96, %s110
      %p112 = scmp.eq.s32.totalorder %s23, 0
      %p113 = por %p111, %p112
      %s115 = sadd.s32 %s114, 1
      %p118 = scmp.eq.s32.totalorder %s17, 1
      %p119 = scmp.ne.s32.totalorder %s114, %s116
      %p120 = scmp.eq.s32.totalorder %s17, 0
      %p121 = por %p119, %p120
      %p122 = scmp.ne.s32.totalorder %s114, %s116
      %p123 = scmp.eq.s32.totalorder %s22, 1
      %p124 = por %p122, %p123
      %p125 = scmp.ne.s32.totalorder %s116, %s117
      %p126 = scmp.eq.s32.totalorder %s22, 0
      %p127 = por %p125, %p126
      %p128 = scmp.ne.s32.totalorder %s116, %s117
      %p129 = scmp.eq.s32.totalorder %s23, 1
      %p130 = por %p128, %p129
      %p132 = scmp.ne.s32.totalorder %s117, %s131
      %p133 = scmp.eq.s32.totalorder %s23, 0
      %p134 = por %p132, %p133
      %s136 = sadd.s32 %s135, 1
      %p139 = scmp.eq.s32.totalorder %s17, 1
      %p140 = scmp.ne.s32.totalorder %s135, %s137
      %p141 = scmp.eq.s32.totalorder %s17, 0
      %p142 = por %p140, %p141
      %p143 = scmp.ne.s32.totalorder %s135, %s137
      %p144 = scmp.eq.s32.totalorder %s22, 1
      %p145 = por %p143, %p144
      %p146 = scmp.ne.s32.totalorder %s137, %s138
      %p147 = scmp.eq.s32.totalorder %s22, 0
      %p148 = por %p146, %p147
      %p149 = scmp.ne.s32.totalorder %s137, %s138
      %p150 = scmp.eq.s32.totalorder %s23, 1
      %p151 = por %p149, %p150
      %p153 = scmp.ne.s32.totalorder %s138, %s152
      %p154 = scmp.eq.s32.totalorder %s23, 0
      %p155 = por %p153, %p154
      %s156 = ssub.s32 %s17, %s24
      %p157 = scmp.eq.s32.totalorder %s156, 0
      %s159 = sadd.s32 %s158, 1
      %s160 = scalar_select %p157, %s158, %s159
      %p163 = pneg %p157
      %p164 = scmp.eq.s32.totalorder %s17, 1
      %p165 = por %p163, %p164
      %p166 = scmp.ne.s32.totalorder %s158, %s161
      %p167 = scmp.eq.s32.totalorder %s17, 0
      %p168 = por %p166, %p167
      %p169 = scmp.ne.s32.totalorder %s158, %s161
      %p170 = scmp.eq.s32.totalorder %s22, 1
      %p171 = por %p169, %p170
      %p172 = scmp.ne.s32.totalorder %s161, %s162
      %p173 = scmp.eq.s32.totalorder %s22, 0
      %p174 = por %p172, %p173
      %p175 = scmp.ne.s32.totalorder %s161, %s162
      %p176 = scmp.eq.s32.totalorder %s23, 1
      %p177 = por %p175, %p176
      %p179 = scmp.ne.s32.totalorder %s162, %s178
      %p180 = scmp.eq.s32.totalorder %s23, 0
      %p181 = por %p179, %p180
      %s182 = ssub.s32 %s17, %s24
      %p183 = scmp.eq.s32.totalorder %s182, 0
      %s185 = sadd.s32 %s184, 1
      %s186 = scalar_select %p183, %s184, %s185
      %p189 = pneg %p183
      %p190 = scmp.eq.s32.totalorder %s17, 1
      %p191 = por %p189, %p190
      %p192 = scmp.ne.s32.totalorder %s184, %s187
      %p193 = scmp.eq.s32.totalorder %s17, 0
      %p194 = por %p192, %p193
      %p195 = scmp.ne.s32.totalorder %s184, %s187
      %p196 = scmp.eq.s32.totalorder %s22, 1
      %p197 = por %p195, %p196
      %p198 = scmp.ne.s32.totalorder %s187, %s188
      %p199 = scmp.eq.s32.totalorder %s22, 0
      %p200 = por %p198, %p199
      %p201 = scmp.ne.s32.totalorder %s187, %s188
      %p202 = scmp.eq.s32.totalorder %s23, 1
      %p203 = por %p201, %p202
      %p205 = scmp.ne.s32.totalorder %s188, %s204
      %p206 = scmp.eq.s32.totalorder %s23, 0
      %p207 = por %p205, %p206
      %s208 = ssub.s32 %s17, %s24
      %p209 = scmp.eq.s32.totalorder %s208, 0
      %s211 = sadd.s32 %s210, 1
      %s212 = scalar_select %p209, %s210, %s211
      %p215 = pneg %p209
      %p216 = scmp.eq.s32.totalorder %s17, 1
      %p217 = por %p215, %p216
      %p218 = scmp.ne.s32.totalorder %s210, %s213
      %p219 = scmp.eq.s32.totalorder %s17, 0
      %p220 = por %p218, %p219
      %p221 = scmp.ne.s32.totalorder %s210, %s213
      %p222 = scmp.eq.s32.totalorder %s22, 1
      %p223 = por %p221, %p222
      %p224 = scmp.ne.s32.totalorder %s213, %s214
      %p225 = scmp.eq.s32.totalorder %s22, 0
      %p226 = por %p224, %p225
      %p227 = scmp.ne.s32.totalorder %s213, %s214
      %p228 = scmp.eq.s32.totalorder %s23, 1
      %p229 = por %p227, %p228
      %p231 = scmp.ne.s32.totalorder %s214, %s230
      %p232 = scmp.eq.s32.totalorder %s23, 0
      %p233 = por %p231, %p232
      %p234 = scmp.le.s32.totalorder 1, %s17
      %p235 = scmp.lt.s32.totalorder %s17, 3
      %p236 = pnand %p234, %p235
      %p237 = pneg %p236
      // Predicated region
      $region9: #{tpu_custom_call.1} parent=5 // pred_check
        _
      $region10: #{tpu_custom_call.1} parent=5 // pred_check_branch
        %239 = sbr.rel (%p236) target = $region12
      $region11: #{tpu_custom_call.1} parent=5 // pred_region
        %s240 = ssub.s32 %s17, 1
        // Predicated region
        $region13: #{tpu_custom_call.1} parent=11 // pred_check
          %p241 = pneg %p64
        $region14: #{tpu_custom_call.1} parent=11 // pred_check_branch
          %243 = sbr.rel (%p241) target = $region16
        $region15: #{tpu_custom_call.1} parent=11 // pred_region
          _
        $region16: #{tpu_custom_call.1} parent=11 // pred_fallthru
          _
        // Predicated region
        $region17: #{tpu_custom_call.1} parent=11 // pred_check
          %p244 = pneg %p85
        $region18: #{tpu_custom_call.1} parent=11 // pred_check_branch
          %246 = sbr.rel (%p244) target = $region20
        $region19: #{tpu_custom_call.1} parent=11 // pred_region
          _
        $region20: #{tpu_custom_call.1} parent=11 // pred_fallthru
          _
        // Predicated region
        $region21: #{tpu_custom_call.1} parent=11 // pred_check
          %p247 = pneg %p106
        $region22: #{tpu_custom_call.1} parent=11 // pred_check_branch
          %249 = sbr.rel (%p247) target = $region24
        $region23: #{tpu_custom_call.1} parent=11 // pred_region
          _
        $region24: #{tpu_custom_call.1} parent=11 // pred_fallthru
          _
        // Predicated region
        $region25: #{tpu_custom_call.1} parent=11 // pred_check
          %p250 = pneg %p127
        $region26: #{tpu_custom_call.1} parent=11 // pred_check_branch
          %252 = sbr.rel (%p250) target = $region28
        $region27: #{tpu_custom_call.1} parent=11 // pred_region
          _
        $region28: #{tpu_custom_call.1} parent=11 // pred_fallthru
          _
        // Predicated region
        $region29: #{tpu_custom_call.1} parent=11 // pred_check
          %p253 = pneg %p148
        $region30: #{tpu_custom_call.1} parent=11 // pred_check_branch
          %255 = sbr.rel (%p253) target = $region32
        $region31: #{tpu_custom_call.1} parent=11 // pred_region
          _
        $region32: #{tpu_custom_call.1} parent=11 // pred_fallthru
          _
      $region12: #{tpu_custom_call.1} parent=5 // pred_fallthru
        _
      %p256 = scmp.lt.s32.totalorder %s17, 2
      // Predicated region
      $region33: #{tpu_custom_call.1} parent=5 // pred_check
        %p257 = pneg %p256
      $region34: #{tpu_custom_call.1} parent=5 // pred_check_branch
        %259 = sbr.rel (%p257) target = $region36
      $region35: #{tpu_custom_call.1} parent=5 // pred_region
        // Predicated region
        $region37: #{tpu_custom_call.1} parent=35 // pred_check
          %p260 = pneg %p37
        $region38: #{tpu_custom_call.1} parent=35 // pred_check_branch
          %262 = sbr.rel (%p260) target = $region40
        $region39: #{tpu_custom_call.1} parent=35 // pred_region
          %p263 = scmp.lt.s32.totalorder %s17, 1
          %s264 = scalar_select %p263, %s17, 1
          %s265 = smul.addr %s264, 8
          %s266 = scalar_lea.vmem %s0, %s265
        $region40: #{tpu_custom_call.1} parent=35 // pred_fallthru
          _
        // Predicated region
        $region41: #{tpu_custom_call.1} parent=35 // pred_check
          %p267 = pneg %p168
        $region42: #{tpu_custom_call.1} parent=35 // pred_check_branch
          %269 = sbr.rel (%p267) target = $region44
        $region43: #{tpu_custom_call.1} parent=35 // pred_region
          %p270 = scmp.lt.s32.totalorder %s17, 1
          %s271 = scalar_select %p270, %s17, 1
          %s272 = smul.addr %s271, 4
          %s273 = smul.addr %s272, 8
          %s274 = scalar_lea.vmem %s6, %s273
        $region44: #{tpu_custom_call.1} parent=35 // pred_fallthru
          _
        // Predicated region
        $region45: #{tpu_custom_call.1} parent=35 // pred_check
          %p275 = pneg %p194
        $region46: #{tpu_custom_call.1} parent=35 // pred_check_branch
          %277 = sbr.rel (%p275) target = $region48
        $region47: #{tpu_custom_call.1} parent=35 // pred_region
          %p278 = scmp.lt.s32.totalorder %s17, 1
          %s279 = scalar_select %p278, %s17, 1
          %s280 = smul.addr %s279, 4
          %s281 = smul.addr %s280, 8
          %s282 = scalar_lea.vmem %s7, %s281
        $region48: #{tpu_custom_call.1} parent=35 // pred_fallthru
          _
      $region36: #{tpu_custom_call.1} parent=5 // pred_fallthru
        _
      %p283 = scmp.le.s32.totalorder 1, %s17
      %p284 = scmp.lt.s32.totalorder %s17, 3
      %p285 = pnand %p283, %p284
      %p286 = pneg %p285
      // Predicated region
      $region49: #{tpu_custom_call.1} parent=5 // pred_check
        _
      $region50: #{tpu_custom_call.1} parent=5 // pred_check_branch
        %288 = sbr.rel (%p285) target = $region52
      $region51: #{tpu_custom_call.1} parent=5 // pred_region
        %s289 = ssub.s32 %s17, 1
        %p290 = scmp.lt.s32.totalorder %s22, 1
        %s291 = scalar_select %p290, %s22, 1
        %s292 = smul.addr %s291, 8
        %s293 = scalar_lea.vmem %s0, %s292
        %p294 = pneg %p43
        %p295 = pneg %p40
        %p296 = pneg %p64
        %p297 = pneg %p61
        %p298 = pneg %p85
        %p299 = pneg %p82
        %p300 = pneg %p106
        %p301 = pneg %p103
        %p302 = pneg %p127
        %p303 = pneg %p124
        %p304 = pneg %p148
        %p305 = pneg %p145
        %p306 = scmp.lt.s32.totalorder %s22, 1
        %s307 = scalar_select %p306, %s22, 1
        %s308 = smul.addr %s307, 4
        %s309 = smul.addr %s308, 8
        %s310 = scalar_lea.vmem %s6, %s309
        %p311 = pneg %p174
        %p312 = pneg %p171
        %p313 = scmp.lt.s32.totalorder %s22, 1
        %s314 = scalar_select %p313, %s22, 1
        %s315 = smul.addr %s314, 4
        %s316 = smul.addr %s315, 8
        %s317 = scalar_lea.vmem %s7, %s316
        %p318 = pneg %p200
        %p319 = pneg %p197
        %p320 = pneg %p226
        %p321 = pneg %p223
        %s322 = sand.u32 %s213, 1
        %s323 = scalar_lea.sflag [#allocation3], %s322
        %s324 = sand.u32 %s213, 1
        %s325 = smul.addr %s324, 32
        %s326 = scalar_lea.vmem [#allocation2], %s325
        %p327 = scmp.lt.s32.totalorder %s22, 1
        %s328 = scalar_select %p327, %s22, 1
        %s329 = smul.addr %s328, 8
        %s330 = scalar_lea.vmem %s0, %s329
        %p331 = scmp.lt.s32.totalorder %s22, 1
        %s332 = scalar_select %p331, %s22, 1
        %s333 = smul.addr %s332, 4
        %s334 = smul.addr %s333, 8
        %s335 = scalar_lea.vmem %s6, %s334
        %p336 = scmp.lt.s32.totalorder %s22, 1
        %s337 = scalar_select %p336, %s22, 1
        %s338 = smul.addr %s337, 4
        %s339 = smul.addr %s338, 8
        %s340 = scalar_lea.vmem %s7, %s339
        %v341 = vld [vmem:[%s330] sm:$0xff]
        %v342 = vlaneseq
        %v343 = vand.u32 %v342, 127
        %344 = vrot.lane.b32.xlu0 %v341, 1
        %v345 = vpop.permute.xlu0 %344
        %346 = vrot.lane.b32.xlu0 %v341, 127
        %v347 = vpop.permute.xlu0 %346
        %v348 = vld [vmem:[%s1] sm:$0xff]
        %v349 = vld [vmem:[%s1 + $0x8] sm:$0xff]
        %v350 = vld [vmem:[%s1 + $0x10] sm:$0xff]
        %v351 = vld [vmem:[%s1 + $0x18] sm:$0xff]
        %v352 = vld [vmem:[%s2] sm:$0xff]
        %v353 = vld [vmem:[%s2 + $0x8] sm:$0xff]
        %v354 = vld [vmem:[%s2 + $0x10] sm:$0xff]
        %v355 = vld [vmem:[%s2 + $0x18] sm:$0xff]
        %357 = vset.pattern.permute.xlu0 0
        %358 = vperm.xlu0 %357, %v352
        %v359 = vpop.permute.xlu0 %358
        %362 = vset.pattern.permute.xlu0 0
        %363 = vperm.xlu0 %362, %v353
        %v364 = vpop.permute.xlu0 %363
        %367 = vset.pattern.permute.xlu0 0
        %368 = vperm.xlu0 %367, %v354
        %v369 = vpop.permute.xlu0 %368
        %372 = vset.pattern.permute.xlu0 0
        %373 = vperm.xlu0 %372, %v355
        %v374 = vpop.permute.xlu0 %373
        %vm376 = vcmask 195584
        %v378 = vsel %vm376, %v348, 0
        %v381 = vsel %vm376, %v349, 0
        %v384 = vsel %vm376, %v350, 0
        %v387 = vsel %vm376, %v351, 0
        %389 = vmatpush.msra.mxu0 0.0
        %390 = vmatpush.msra.mxu0 0.0
        %391 = vmatpush.msra.mxu0 0.0
        %392 = vmatpush.msra.mxu0 0.0
        %393 = vmatpush.msra.mxu0 0.0
        %394 = vmatpush.msra.mxu0 0.0
        %395 = vmatpush.msra.mxu0 0.0
        %396 = vmatpush.msra.mxu0 0.0
        %397 = vmatpush.msra.mxu0 0.0
        %398 = vmatpush.msra.mxu0 0.0
        %399 = vmatpush.msra.mxu0 0.0
        %400 = vmatpush.msra.mxu0 0.0
        %401 = vmatpush.msra.mxu0 0.0
        %402 = vmatpush.msra.mxu0 %v347
        %403 = vmatpush.msra.mxu0 %v341
        %404 = vmatpush.msra.mxu0 %v345
        %405 = vmatmul.f32.gmra.mxu0 %v378
        %v406 = vpop.f32.mrf.mxu0
        %v407 = vadd.f32 %v359, %v406
        %408 = vmatmul.f32.gmra.mxu0 %v381
        %v409 = vpop.f32.mrf.mxu0
        %v410 = vadd.f32 %v364, %v409
        %411 = vmatmul.f32.gmra.mxu0 %v384
        %v412 = vpop.f32.mrf.mxu0
        %v413 = vadd.f32 %v369, %v412
        %414 = vmatmul.f32.gmra.mxu0 %v387
        %v415 = vpop.f32.mrf.mxu0
        %v416 = vadd.f32 %v374, %v415
        %417 = vdwg.mxu0
        %vm418 = vcmp.lt.s32.totalorder %v343, 16
        %v419 = vsel %vm418, 1, 0
        %v420 = vcvt.s32.f32 %v419
        %v421 = vmul.f32 %v407, %v420
        %v422 = vmul.f32 %v410, %v420
        %v423 = vmul.f32 %v413, %v420
        %v424 = vmul.f32 %v416, %v420
        %425 = vadd.xlane.f32.xlu0 %v421
        %v426 = vpop.xlane.xlu0 %425
        %427 = vadd.xlane.f32.xlu0 %v422
        %v428 = vpop.xlane.xlu0 %427
        %429 = vadd.xlane.f32.xlu0 %v423
        %v430 = vpop.xlane.xlu0 %429
        %431 = vadd.xlane.f32.xlu0 %v424
        %v432 = vpop.xlane.xlu0 %431
        %v433 = vmul.f32 %v421, %v421
        %v434 = vmul.f32 %v422, %v422
        %v435 = vmul.f32 %v423, %v423
        %v436 = vmul.f32 %v424, %v424
        %437 = vadd.xlane.f32.xlu0 %v433
        %v438 = vpop.xlane.xlu0 %437
        %439 = vadd.xlane.f32.xlu0 %v434
        %v440 = vpop.xlane.xlu0 %439
        %441 = vadd.xlane.f32.xlu0 %v435
        %v442 = vpop.xlane.xlu0 %441
        %443 = vadd.xlane.f32.xlu0 %v436
        %v444 = vpop.xlane.xlu0 %443
        %v445 = vld [vmem:[%s3] sm:$0xff]
        %v446 = vld [vmem:[%s3 + $0x8] sm:$0xff]
        %v447 = vld [vmem:[%s3 + $0x10] sm:$0xff]
        %v448 = vld [vmem:[%s3 + $0x18] sm:$0xff]
        %vm449 = vcmask 261120
        %v451 = vsel %vm449, %v445, 0
        %v454 = vsel %vm449, %v446, 0
        %v457 = vsel %vm449, %v447, 0
        %v460 = vsel %vm449, %v448, 0
        %462 = vmatpush.msra.mxu0 0.0
        %463 = vmatpush.msra.mxu0 0.0
        %464 = vmatpush.msra.mxu0 0.0
        %465 = vmatpush.msra.mxu0 0.0
        %466 = vmatpush.msra.mxu0 0.0
        %467 = vmatpush.msra.mxu0 0.0
        %468 = vmatpush.msra.mxu0 0.0
        %469 = vmatpush.msra.mxu0 0.0
        %470 = vmatpush.msra.mxu0 0.0
        %471 = vmatpush.msra.mxu0 0.0
        %472 = vmatpush.msra.mxu0 0.0
        %473 = vmatpush.msra.mxu0 0.0
        %474 = vmatpush.msra.mxu0 %v432
        %475 = vmatpush.msra.mxu0 %v430
        %476 = vmatpush.msra.mxu0 %v428
        %477 = vmatpush.msra.mxu0 %v426
        %478 = vmatmul.f32.gmra.mxu0 %v451
        %v479 = vpop.f32.mrf.mxu0
        %v480 = vadd.f32 0.0, %v479
        %481 = vmatmul.f32.gmra.mxu0 %v454
        %v482 = vpop.f32.mrf.mxu0
        %v483 = vadd.f32 0.0, %v482
        %484 = vmatmul.f32.gmra.mxu0 %v457
        %v485 = vpop.f32.mrf.mxu0
        %v486 = vadd.f32 0.0, %v485
        %487 = vmatmul.f32.gmra.mxu0 %v460
        %v488 = vpop.f32.mrf.mxu0
        %v489 = vadd.f32 0.0, %v488
        %490 = vdwg.mxu0
        %491 = vmatpush.msra.mxu0 0.0
        %492 = vmatpush.msra.mxu0 0.0
        %493 = vmatpush.msra.mxu0 0.0
        %494 = vmatpush.msra.mxu0 0.0
        %495 = vmatpush.msra.mxu0 0.0
        %496 = vmatpush.msra.mxu0 0.0
        %497 = vmatpush.msra.mxu0 0.0
        %498 = vmatpush.msra.mxu0 0.0
        %499 = vmatpush.msra.mxu0 0.0
        %500 = vmatpush.msra.mxu0 0.0
        %501 = vmatpush.msra.mxu0 0.0
        %502 = vmatpush.msra.mxu0 0.0
        %503 = vmatpush.msra.mxu0 %v444
        %504 = vmatpush.msra.mxu0 %v442
        %505 = vmatpush.msra.mxu0 %v440
        %506 = vmatpush.msra.mxu0 %v438
        %507 = vmatmul.f32.gmra.mxu0 %v451
        %v508 = vpop.f32.mrf.mxu0
        %v509 = vadd.f32 0.0, %v508
        %510 = vmatmul.f32.gmra.mxu0 %v454
        %v511 = vpop.f32.mrf.mxu0
        %v512 = vadd.f32 0.0, %v511
        %513 = vmatmul.f32.gmra.mxu0 %v457
        %v514 = vpop.f32.mrf.mxu0
        %v515 = vadd.f32 0.0, %v514
        %516 = vmatmul.f32.gmra.mxu0 %v460
        %v517 = vpop.f32.mrf.mxu0
        %v518 = vadd.f32 0.0, %v517
        %519 = vdwg.mxu0
        %v520 = vmul.f32 %v480, 0.015625
        %v521 = vmul.f32 %v483, 0.015625
        %v522 = vmul.f32 %v486, 0.015625
        %v523 = vmul.f32 %v489, 0.015625
        %v524 = vmul.f32 %v509, 0.015625
        %v525 = vmul.f32 %v512, 0.015625
        %v526 = vmul.f32 %v515, 0.015625
        %v527 = vmul.f32 %v518, 0.015625
        %v528 = vmul.f32 %v520, %v520
        %v529 = vmul.f32 %v521, %v521
        %v530 = vmul.f32 %v522, %v522
        %v531 = vmul.f32 %v523, %v523
        %v532 = vsub.f32 %v524, %v528
        %v533 = vsub.f32 %v525, %v529
        %v534 = vsub.f32 %v526, %v530
        %v535 = vsub.f32 %v527, %v531
        %v536 = vmax.f32 %v532, 0.0
        %v537 = vmax.f32 %v533, 0.0
        %v538 = vmax.f32 %v534, 0.0
        %v539 = vmax.f32 %v535, 0.0
        %v540 = vadd.f32 %v536, 1e-05
        %v541 = vadd.f32 %v537, 1e-05
        %v542 = vadd.f32 %v538, 1e-05
        %v543 = vadd.f32 %v539, 1e-05
        %v544 = vrsqrt.pop %v540
        %v545 = vmul.f32 %v544, %v540
        %v546 = vmul.f32 %v545, %v544
        %v547 = vmul.f32 0.5, %v546
        %v548 = vsub.f32 1.5, %v547
        %v549 = vmul.f32 %v544, %v548
        %vm550 = vweird.f32 %v540
        %vm551 = vweird.f32 %v544
        %vm552 = vmor %vm550, %vm551
        %v553 = vsel %vm552, %v544, %v549
        %v554 = vrsqrt.pop %v541
        %v555 = vmul.f32 %v554, %v541
        %v556 = vmul.f32 %v555, %v554
        %v557 = vmul.f32 0.5, %v556
        %v558 = vsub.f32 1.5, %v557
        %v559 = vmul.f32 %v554, %v558
        %vm560 = vweird.f32 %v541
        %vm561 = vweird.f32 %v554
        %vm562 = vmor %vm560, %vm561
        %v563 = vsel %vm562, %v554, %v559
        %v564 = vrsqrt.pop %v542
        %v565 = vmul.f32 %v564, %v542
        %v566 = vmul.f32 %v565, %v564
        %v567 = vmul.f32 0.5, %v566
        %v568 = vsub.f32 1.5, %v567
        %v569 = vmul.f32 %v564, %v568
        %vm570 = vweird.f32 %v542
        %vm571 = vweird.f32 %v564
        %vm572 = vmor %vm570, %vm571
        %v573 = vsel %vm572, %v564, %v569
        %v574 = vrsqrt.pop %v543
        %v575 = vmul.f32 %v574, %v543
        %v576 = vmul.f32 %v575, %v574
        %v577 = vmul.f32 0.5, %v576
        %v578 = vsub.f32 1.5, %v577
        %v579 = vmul.f32 %v574, %v578
        %vm580 = vweird.f32 %v543
        %vm581 = vweird.f32 %v574
        %vm582 = vmor %vm580, %vm581
        %v583 = vsel %vm582, %v574, %v579
        %v584 = vld [vmem:[%s4] sm:$0xff]
        %v585 = vld [vmem:[%s4 + $0x8] sm:$0xff]
        %v586 = vld [vmem:[%s4 + $0x10] sm:$0xff]
        %v587 = vld [vmem:[%s4 + $0x18] sm:$0xff]
        %v588 = vmul.f32 %v553, %v584
        %v589 = vmul.f32 %v563, %v585
        %v590 = vmul.f32 %v573, %v586
        %v591 = vmul.f32 %v583, %v587
        %v592 = vld [vmem:[%s5] sm:$0xff]
        %v593 = vld [vmem:[%s5 + $0x8] sm:$0xff]
        %v594 = vld [vmem:[%s5 + $0x10] sm:$0xff]
        %v595 = vld [vmem:[%s5 + $0x18] sm:$0xff]
        %v596 = vmul.f32 %v520, %v588
        %v597 = vmul.f32 %v521, %v589
        %v598 = vmul.f32 %v522, %v590
        %v599 = vmul.f32 %v523, %v591
        %v600 = vsub.f32 %v592, %v596
        %v601 = vsub.f32 %v593, %v597
        %v602 = vsub.f32 %v594, %v598
        %v603 = vsub.f32 %v595, %v599
        %v604 = vld [vmem:[%s335] sm:$0xff]
        %v605 = vld [vmem:[%s335 + $0x8] sm:$0xff]
        %v606 = vld [vmem:[%s335 + $0x10] sm:$0xff]
        %v607 = vld [vmem:[%s335 + $0x18] sm:$0xff]
        %v608 = vadd.f32 %v604, 1.0
        %v609 = vadd.f32 %v605, 1.0
        %v610 = vadd.f32 %v606, 1.0
        %v611 = vadd.f32 %v607, 1.0
        %v612 = vmul.f32 %v588, %v608
        %v613 = vmul.f32 %v589, %v609
        %v614 = vmul.f32 %v590, %v610
        %v615 = vmul.f32 %v591, %v611
        %v616 = vmul.f32 %v600, %v608
        %v617 = vmul.f32 %v601, %v609
        %v618 = vmul.f32 %v602, %v610
        %v619 = vmul.f32 %v603, %v611
        %v620 = vld [vmem:[%s340] sm:$0xff]
        %v621 = vld [vmem:[%s340 + $0x8] sm:$0xff]
        %v622 = vld [vmem:[%s340 + $0x10] sm:$0xff]
        %v623 = vld [vmem:[%s340 + $0x18] sm:$0xff]
        %v624 = vadd.f32 %v616, %v620
        %v625 = vadd.f32 %v617, %v621
        %v626 = vadd.f32 %v618, %v622
        %v627 = vadd.f32 %v619, %v623
        %629 = vset.pattern.permute.xlu0 0
        %630 = vperm.xlu0 %629, %v612
        %v631 = vpop.permute.xlu0 %630
        %634 = vset.pattern.permute.xlu0 0
        %635 = vperm.xlu0 %634, %v613
        %v636 = vpop.permute.xlu0 %635
        %639 = vset.pattern.permute.xlu0 0
        %640 = vperm.xlu0 %639, %v614
        %v641 = vpop.permute.xlu0 %640
        %644 = vset.pattern.permute.xlu0 0
        %645 = vperm.xlu0 %644, %v615
        %v646 = vpop.permute.xlu0 %645
        %v648 = vmul.f32 %v407, %v631
        %v649 = vmul.f32 %v410, %v636
        %v650 = vmul.f32 %v413, %v641
        %v651 = vmul.f32 %v416, %v646
        %653 = vset.pattern.permute.xlu0 0
        %654 = vperm.xlu0 %653, %v624
        %v655 = vpop.permute.xlu0 %654
        %658 = vset.pattern.permute.xlu0 0
        %659 = vperm.xlu0 %658, %v625
        %v660 = vpop.permute.xlu0 %659
        %663 = vset.pattern.permute.xlu0 0
        %664 = vperm.xlu0 %663, %v626
        %v665 = vpop.permute.xlu0 %664
        %668 = vset.pattern.permute.xlu0 0
        %669 = vperm.xlu0 %668, %v627
        %v670 = vpop.permute.xlu0 %669
        %v672 = vadd.f32 %v648, %v655
        %v673 = vadd.f32 %v649, %v660
        %v674 = vadd.f32 %v650, %v665
        %v675 = vadd.f32 %v651, %v670
        %v676 = vxor.u32 %v672, 2147483648
        %v677 = vxor.u32 %v673, 2147483648
        %v678 = vxor.u32 %v674, 2147483648
        %v679 = vxor.u32 %v675, 2147483648
        %v680 = vmul.f32 %v676, 1.442695
        %v681 = vpow.pop %v680
        %v682 = vmul.f32 %v677, 1.442695
        %v683 = vpow.pop %v682
        %v684 = vmul.f32 %v678, 1.442695
        %v685 = vpow.pop %v684
        %v686 = vmul.f32 %v679, 1.442695
        %v687 = vpow.pop %v686
        %v688 = vadd.f32 %v681, 1.0
        %v689 = vadd.f32 %v683, 1.0
        %v690 = vadd.f32 %v685, 1.0
        %v691 = vadd.f32 %v687, 1.0
        %v692 = vrcp.pop %v688
        %v693 = vmul.f32 %v688, %v692
        %v694 = vsub.f32 1.0, %v693
        %v695 = vmul.f32 %v692, %v694
        %v696 = vadd.f32 %v692, %v695
        %vm697 = vweird.f32 %v688
        %vm698 = vweird.f32 %v692
        %vm699 = vmor %vm697, %vm698
        %v700 = vsel %vm699, %v692, %v696
        %v701 = vand.u32 2147483647, %v688
        %vm702 = vcmp.eq.f32.partialorder %v701, 8.507059e+37
        %v703 = vand.u32 %v688, 2147483648
        %v704 = vor.u32 1.1754944e-38, %v703
        %v705 = vsel %vm702, %v704, %v700
        %v706 = vmul.f32 1.0, %v705
        %v707 = vrcp.pop %v689
        %v708 = vmul.f32 %v689, %v707
        %v709 = vsub.f32 1.0, %v708
        %v710 = vmul.f32 %v707, %v709
        %v711 = vadd.f32 %v707, %v710
        %vm712 = vweird.f32 %v689
        %vm713 = vweird.f32 %v707
        %vm714 = vmor %vm712, %vm713
        %v715 = vsel %vm714, %v707, %v711
        %v716 = vand.u32 2147483647, %v689
        %vm717 = vcmp.eq.f32.partialorder %v716, 8.507059e+37
        %v718 = vand.u32 %v689, 2147483648
        %v719 = vor.u32 1.1754944e-38, %v718
        %v720 = vsel %vm717, %v719, %v715
        %v721 = vmul.f32 1.0, %v720
        %v722 = vrcp.pop %v690
        %v723 = vmul.f32 %v690, %v722
        %v724 = vsub.f32 1.0, %v723
        %v725 = vmul.f32 %v722, %v724
        %v726 = vadd.f32 %v722, %v725
        %vm727 = vweird.f32 %v690
        %vm728 = vweird.f32 %v722
        %vm729 = vmor %vm727, %vm728
        %v730 = vsel %vm729, %v722, %v726
        %v731 = vand.u32 2147483647, %v690
        %vm732 = vcmp.eq.f32.partialorder %v731, 8.507059e+37
        %v733 = vand.u32 %v690, 2147483648
        %v734 = vor.u32 1.1754944e-38, %v733
        %v735 = vsel %vm732, %v734, %v730
        %v736 = vmul.f32 1.0, %v735
        %v737 = vrcp.pop %v691
        %v738 = vmul.f32 %v691, %v737
        %v739 = vsub.f32 1.0, %v738
        %v740 = vmul.f32 %v737, %v739
        %v741 = vadd.f32 %v737, %v740
        %vm742 = vweird.f32 %v691
        %vm743 = vweird.f32 %v737
        %vm744 = vmor %vm742, %vm743
        %v745 = vsel %vm744, %v737, %v741
        %v746 = vand.u32 2147483647, %v691
        %vm747 = vcmp.eq.f32.partialorder %v746, 8.507059e+37
        %v748 = vand.u32 %v691, 2147483648
        %v749 = vor.u32 1.1754944e-38, %v748
        %v750 = vsel %vm747, %v749, %v745
        %v751 = vmul.f32 1.0, %v750
        %v752 = vmul.f32 %v672, %v706
        %v753 = vmul.f32 %v673, %v721
        %v754 = vmul.f32 %v674, %v736
        %v755 = vmul.f32 %v675, %v751
        %v756 = vmul.f32 %v752, %v420
        %v757 = vmul.f32 %v753, %v420
        %v758 = vmul.f32 %v754, %v420
        %v759 = vmul.f32 %v755, %v420
        %760 = vst [vmem:[%s326] sm:$0xff] %v756
        %761 = vst [vmem:[%s326 + $0x8] sm:$0xff] %v757
        %762 = vst [vmem:[%s326 + $0x10] sm:$0xff] %v758
        %763 = vst [vmem:[%s326 + $0x18] sm:$0xff] %v759
        %s764 = sand.u32 %s213, 1
        %s765 = scalar_lea.sflag [#allocation3], %s764
        %s766 = sand.u32 %s213, 1
        %s767 = smul.addr %s766, 32
        %s768 = scalar_lea.vmem [#allocation2], %s767
        // Predicated region
        $region53: #{tpu_custom_call.1} parent=51 // pred_check
          %p769 = pneg %p223
        $region54: #{tpu_custom_call.1} parent=51 // pred_check_branch
          %771 = sbr.rel (%p769) target = $region56
        $region55: #{tpu_custom_call.1} parent=51 // pred_region
          %773 = vsyncadd %s765, 0
          %s774 = smul.addr %s22, 4
          %s775 = smul.addr %s774, 8
          %s776 = scalar_lea.hbm %s8, %s775
          %s777 = sshll.u32 %s768, 4
          %s778 = int_to_ptr.vmem [resolvable:$true] %s777
          %s779 = sshll.u32 %s776, 4
          %s780 = int_to_ptr.hbm [resolvable:$true] %s779
          %785 = dma.vmem_to_hbm [thread:$0]  %s778, 512, %s780, %s765, 128, 128, 8
        $region56: #{tpu_custom_call.1} parent=51 // pred_fallthru
          _
      $region52: #{tpu_custom_call.1} parent=5 // pred_fallthru
        _
      %p786 = scmp.le.s32.totalorder 2, %s17
      // Predicated region
      $region57: #{tpu_custom_call.1} parent=5 // pred_check
        %p787 = pneg %p786
      $region58: #{tpu_custom_call.1} parent=5 // pred_check_branch
        %789 = sbr.rel (%p787) target = $region60
      $region59: #{tpu_custom_call.1} parent=5 // pred_region
        %s790 = ssub.s32 %s17, 2
        // Predicated region
        $region61: #{tpu_custom_call.1} parent=59 // pred_check
          %p791 = pneg %p229
        $region62: #{tpu_custom_call.1} parent=59 // pred_check_branch
          %793 = sbr.rel (%p791) target = $region64
        $region63: #{tpu_custom_call.1} parent=59 // pred_region
          %s794 = sand.u32 %s214, 1
          %s795 = scalar_lea.sflag [#allocation3], %s794
          %s796 = sand.u32 %s214, 1
          %s797 = smul.addr %s796, 32
          %s798 = scalar_lea.vmem [#allocation2], %s797
          %800 = dma.done %s795, 512
        $region64: #{tpu_custom_call.1} parent=59 // pred_fallthru
          _
      $region60: #{tpu_custom_call.1} parent=5 // pred_fallthru
        _
    $region6: #{tpu_custom_call.1} parent=1 // loop_footer
      %s21 = sadd.s32 1, %s17
    $region7: #{tpu_custom_call.1} parent=1 // loop_footer_branch
      %16 = sbr.rel target = $region3
    $region8: #{tpu_custom_call.1} parent=1 // loop_exit
      _
    %801 = vsyncpa [#allocation3], 1
    %s802 = scalar_lea.sflag [#allocation3], 1
    %803 = vsyncpa %s802, 1

</llo_original>
